<compile_context>
chip_gen: v5e
topology: v5e:2x2
jax: 0.10.0
libtpu: 0.0.40
codegen_flags: <defaults>
</compile_context>

<pallas_src>
import jax
import jax.numpy as jnp
from jax.experimental import pallas as pl
from jax.experimental.pallas import tpu as pltpu

NOISE_DIM = 10
COND_DIM = 3
IN_DIM = NOISE_DIM + COND_DIM       # 13
H1, H2, H3, OUT = 64, 128, 64, 3
BN_EPS = 1e-5
LEAKY_SLOPE = 0.2

LANE = 128                          # lane-dense feature width for all layers

# Row offsets inside the packed weight slab (all multiples of 8 -> aligned views)
R_W1Z = 0                           # (10, 128)  Linear1 weight, z part
R_W1C = 16                          # (3, 128)   Linear1 weight, cond part
R_W2 = 24                           # (128, 128) Linear2 weight (rows 64: zero)
R_W3 = 152                          # (128, 128) Linear3 weight (cols 64: zero)
R_W4 = 280                          # (128, 128) Linear4 weight (rows 64:, cols 3: zero)
W_ROWS = 408
V_ROWS = 10                         # b1,g1,be1,b2,g2,be2,b3,g3,be3,b4


def _generator_kernel(z_ref, cond_ref, w_ref, v_ref, o_ref):
    """Whole forward pass; entire batch resident in VMEM (exact batch-stats BN)."""
    inv_n = 1.0 / z_ref.shape[0]    # static

    def bn_lrelu(h, g, b):
        # training-mode BatchNorm1d (batch mean, biased batch variance):
        # one reduction sweep + folded affine.  Padded columns (g=b=0, h col=0)
        # give scale=0, shift=0 -> stay exactly zero.
        s1 = jnp.sum(h, axis=0, keepdims=True)
        s2 = jnp.sum(h * h, axis=0, keepdims=True)
        mu = s1 * inv_n
        var = s2 * inv_n - mu * mu
        scale = g * jax.lax.rsqrt(var + BN_EPS)     # (1,128) — negligible
        shift = b - mu * scale
        h = h * scale + shift
        return jnp.maximum(h, LEAKY_SLOPE * h)      # LeakyReLU(0.2), slope < 1

    z = z_ref[...]      # (B, 10)
    c = cond_ref[...]   # (B, 3)

    # Layer 1: split-K dot pair instead of materializing cat([z, cond]).
    h = (jnp.dot(z, w_ref[R_W1Z:R_W1Z + NOISE_DIM, :],
                 preferred_element_type=jnp.float32)
         + jnp.dot(c, w_ref[R_W1C:R_W1C + COND_DIM, :],
                   preferred_element_type=jnp.float32)
         + v_ref[0:1, :])
    h = bn_lrelu(h, v_ref[1:2, :], v_ref[2:3, :])

    # Layer 2
    h = jnp.dot(h, w_ref[R_W2:R_W2 + LANE, :],
                preferred_element_type=jnp.float32) + v_ref[3:4, :]
    h = bn_lrelu(h, v_ref[4:5, :], v_ref[5:6, :])

    # Layer 3
    h = jnp.dot(h, w_ref[R_W3:R_W3 + LANE, :],
                preferred_element_type=jnp.float32) + v_ref[6:7, :]
    h = bn_lrelu(h, v_ref[7:8, :], v_ref[8:9, :])

    # Layer 4 + exact sigmoid via one EUP tanh push: sigmoid(x) = 0.5*tanh(0.5x)+0.5.
    h = jnp.dot(h, w_ref[R_W4:R_W4 + LANE, :],
                preferred_element_type=jnp.float32) + v_ref[9:10, :]
    y = h[:, :OUT]                                  # only the 3 real lanes
    o_ref[...] = 0.5 * jnp.tanh(0.5 * y) + 0.5


def _full_spec(shape):
    # full-array block, no grid
    return pl.BlockSpec(shape, lambda: (0,) * len(shape))


def _cost_estimate(B):
    flops = 2 * B * ((NOISE_DIM + COND_DIM) * LANE + 3 * LANE * LANE)
    bytes_accessed = 4 * (B * NOISE_DIM + B * COND_DIM
                          + W_ROWS * LANE + V_ROWS * LANE + B * OUT)
    return pl.CostEstimate(flops=flops, transcendentals=B * OUT,
                           bytes_accessed=bytes_accessed)


def pack_params(p):
    """One-time host-side packing of the 14 parameter tensors into 2 slabs."""

    def pad_block(w, rows):
        blk = jnp.zeros((rows, LANE), jnp.float32)
        return blk.at[: w.shape[0], : w.shape[1]].set(w.astype(jnp.float32))

    w_slab = jnp.concatenate(
        [
            pad_block(p["w1"][:NOISE_DIM], R_W1C - R_W1Z),   # 16 rows
            pad_block(p["w1"][NOISE_DIM:], R_W2 - R_W1C),    # 8 rows
            pad_block(p["w2"], R_W3 - R_W2),                 # 128 rows
            pad_block(p["w3"], R_W4 - R_W3),                 # 128 rows
            pad_block(p["w4"], W_ROWS - R_W4),               # 128 rows
        ],
        axis=0,
    )  # (408, 128)

    def row(v):
        r = jnp.zeros((1, LANE), jnp.float32)
        return r.at[0, : v.shape[0]].set(v.astype(jnp.float32))

    v_slab = jnp.concatenate(
        [
            row(p["b1"]), row(p["g1"]), row(p["be1"]),
            row(p["b2"]), row(p["g2"]), row(p["be2"]),
            row(p["b3"]), row(p["g3"]), row(p["be3"]),
            row(p["b4"]),
        ],
        axis=0,
    )  # (10, 128)

    return w_slab, v_slab


def generator_forward(z, conditions, packed):
    """z: (B, NOISE_DIM) f32, conditions: (B, COND_DIM) f32 -> (B, 3) f32."""
    w_slab, v_slab = packed
    B = z.shape[0]
    args = (z.astype(jnp.float32), conditions.astype(jnp.float32), w_slab, v_slab)

    return pl.pallas_call(
        _generator_kernel,
        out_shape=jax.ShapeDtypeStruct((B, OUT), jnp.float32),
        in_specs=[_full_spec(a.shape) for a in args],
        out_specs=_full_spec((B, OUT)),
        # Whole-batch activations are ~B * 5*128 * 4 bytes — tiny at these sizes.
        # 32 MiB is also the v7x scoped default; on v5e/v6e this could be raised
        # to ~96-100 MiB to extend the exact-BN ceiling (v7x max ~56 MiB).
        compiler_params=pltpu.CompilerParams(vmem_limit_bytes=32 << 20),
        cost_estimate=_cost_estimate(B),
    )(*args)


def init_params(key):
    """Deterministic PyTorch-style init (Linear weights stored as (in, out))."""
    ks = jax.random.split(key, 8)

    def linear(kw, kb, fan_in, fan_out):
        bound = 1.0 / (fan_in ** 0.5)
        w = jax.random.uniform(kw, (fan_in, fan_out), jnp.float32, -bound, bound)
        b = jax.random.uniform(kb, (fan_out,), jnp.float32, -bound, bound)
        return w, b

    w1, b1 = linear(ks[0], ks[1], IN_DIM, H1)
    w2, b2 = linear(ks[2], ks[3], H1, H2)
    w3, b3 = linear(ks[4], ks[5], H2, H3)
    w4, b4 = linear(ks[6], ks[7], H3, OUT)

    return {
        "w1": w1, "b1": b1,
        "g1": jnp.ones((H1,), jnp.float32), "be1": jnp.zeros((H1,), jnp.float32),
        "w2": w2, "b2": b2,
        "g2": jnp.ones((H2,), jnp.float32), "be2": jnp.zeros((H2,), jnp.float32),
        "w3": w3, "b3": b3,
        "g3": jnp.ones((H3,), jnp.float32), "be3": jnp.zeros((H3,), jnp.float32),
        "w4": w4, "b4": b4,
    }


def _reference_forward(z, conditions, params):
    """Pure-JAX reference (unpacked params).  Runs at 'highest' matmul precision
    so the check measures kernel error, not the reference's default bf16 dots."""
    with jax.default_matmul_precision("highest"):
        x = jnp.concatenate([z, conditions], axis=1)

        def bn(h, g, b):
            mu = jnp.mean(h, axis=0, keepdims=True)
            var = jnp.mean((h - mu) ** 2, axis=0, keepdims=True)
            return (h - mu) * jax.lax.rsqrt(var + BN_EPS) * g + b

        def lrelu(h):
            return jnp.where(h > 0, h, LEAKY_SLOPE * h)

        h = lrelu(bn(x @ params["w1"] + params["b1"], params["g1"], params["be1"]))
        h = lrelu(bn(h @ params["w2"] + params["b2"], params["g2"], params["be2"]))
        h = lrelu(bn(h @ params["w3"] + params["b3"], params["g3"], params["be3"]))
        h = h @ params["w4"] + params["b4"]
        return jax.nn.sigmoid(h)


if __name__ == "__main__":
    key = jax.random.PRNGKey(0)
    k_param, k_data = jax.random.split(key)

    params = init_params(k_param)
    packed = pack_params(params)   # one-time packing; reused across calls

    for B in (8, 128):             # small batch + a sublane/lane-friendly one
        kz, kc = jax.random.split(jax.random.fold_in(k_data, B))
        z = jax.random.normal(kz, (B, NOISE_DIM), jnp.float32)
        conditions = jax.random.uniform(kc, (B, COND_DIM), jnp.float32)

        out = jax.block_until_ready(generator_forward(z, conditions, packed))
        ref = _reference_forward(z, conditions, params)

        assert out.shape == (B, OUT)
        # Sigmoid is exact now; remaining slack covers MXU f32 pass / reduction
        # ordering and the one-pass (sum, sumsq) variance formula vs two-pass.
        max_diff = float(jnp.max(jnp.abs(out - ref)))
        assert jnp.allclose(out, ref, atol=2e-3, rtol=2e-3), (
            f"mismatch vs reference at B={B}: max abs diff {max_diff}")

    print("KERNEL_OK")
</pallas_src>

<mosaic_0001>
module attributes {stable_mosaic.version = 11 : i64} {
  func.func @_generator_kernel(%arg0: memref<8x10xf32, #tpu.memory_space<vmem>>, %arg1: memref<8x3xf32, #tpu.memory_space<vmem>>, %arg2: memref<408x128xf32, #tpu.memory_space<vmem>>, %arg3: memref<10x128xf32, #tpu.memory_space<vmem>>, %arg4: memref<8x3xf32, #tpu.memory_space<vmem>>) attributes {dimension_semantics = [], scalar_prefetch = 0 : i64, scratch_operands = 0 : i64, tpu.core_type = #tpu.core_type<tc>} {
    %c0 = arith.constant 0 : index
    %c0_0 = arith.constant 0 : index
    %0 = vector.load %arg0[%c0, %c0_0] : memref<8x10xf32, #tpu.memory_space<vmem>>, vector<8x10xf32>
    %c0_1 = arith.constant 0 : index
    %c0_2 = arith.constant 0 : index
    %1 = vector.load %arg1[%c0_1, %c0_2] : memref<8x3xf32, #tpu.memory_space<vmem>>, vector<8x3xf32>
    %c0_3 = arith.constant 0 : index
    %c0_4 = arith.constant 0 : index
    %2 = vector.load %arg2[%c0_3, %c0_4] : memref<408x128xf32, #tpu.memory_space<vmem>>, vector<10x128xf32>
    %cst = arith.constant dense<0.000000e+00> : vector<8x128xf32>
    %3 = tpu.matmul %0, %2, %cst {dimension_numbers = #tpu.dot_dimension_numbers<[1], [0], [0], [1], [0, 0, 1, 1], [], []>} : vector<8x10xf32>, vector<10x128xf32>, vector<8x128xf32> -> vector<8x128xf32>
    %c16 = arith.constant 16 : index
    %c0_5 = arith.constant 0 : index
    %4 = vector.load %arg2[%c16, %c0_5] : memref<408x128xf32, #tpu.memory_space<vmem>>, vector<3x128xf32>
    %cst_6 = arith.constant dense<0.000000e+00> : vector<8x128xf32>
    %5 = tpu.matmul %1, %4, %cst_6 {dimension_numbers = #tpu.dot_dimension_numbers<[1], [0], [0], [1], [0, 0, 1, 1], [], []>} : vector<8x3xf32>, vector<3x128xf32>, vector<8x128xf32> -> vector<8x128xf32>
    %6 = arith.addf %3, %5 : vector<8x128xf32>
    %c0_7 = arith.constant 0 : index
    %c0_8 = arith.constant 0 : index
    %7 = vector.load %arg3[%c0_7, %c0_8] : memref<10x128xf32, #tpu.memory_space<vmem>>, vector<1x128xf32>
    %8 = vector.broadcast %7 : vector<1x128xf32> to vector<8x128xf32>
    %9 = arith.addf %6, %8 : vector<8x128xf32>
    %c1 = arith.constant 1 : index
    %c0_9 = arith.constant 0 : index
    %10 = vector.load %arg3[%c1, %c0_9] : memref<10x128xf32, #tpu.memory_space<vmem>>, vector<1x128xf32>
    %c2 = arith.constant 2 : index
    %c0_10 = arith.constant 0 : index
    %11 = vector.load %arg3[%c2, %c0_10] : memref<10x128xf32, #tpu.memory_space<vmem>>, vector<1x128xf32>
    %cst_11 = arith.constant dense<0.000000e+00> : vector<128xf32>
    %12 = vector.multi_reduction <add>, %9, %cst_11 [0] : vector<8x128xf32> to vector<128xf32>
    %13 = vector.shape_cast %12 : vector<128xf32> to vector<1x128xf32>
    %14 = arith.mulf %9, %9 : vector<8x128xf32>
    %cst_12 = arith.constant dense<0.000000e+00> : vector<128xf32>
    %15 = vector.multi_reduction <add>, %14, %cst_12 [0] : vector<8x128xf32> to vector<128xf32>
    %16 = vector.shape_cast %15 : vector<128xf32> to vector<1x128xf32>
    %cst_13 = arith.constant 1.250000e-01 : f32
    %17 = vector.broadcast %cst_13 : f32 to vector<1x128xf32>
    %18 = arith.mulf %13, %17 : vector<1x128xf32>
    %cst_14 = arith.constant 1.250000e-01 : f32
    %19 = vector.broadcast %cst_14 : f32 to vector<1x128xf32>
    %20 = arith.mulf %16, %19 : vector<1x128xf32>
    %21 = arith.mulf %18, %18 : vector<1x128xf32>
    %22 = arith.subf %20, %21 : vector<1x128xf32>
    %cst_15 = arith.constant 9.99999974E-6 : f32
    %23 = vector.broadcast %cst_15 : f32 to vector<1x128xf32>
    %24 = arith.addf %22, %23 : vector<1x128xf32>
    %25 = math.rsqrt %24 : vector<1x128xf32>
    %26 = arith.mulf %10, %25 : vector<1x128xf32>
    %27 = arith.mulf %18, %26 : vector<1x128xf32>
    %28 = arith.subf %11, %27 : vector<1x128xf32>
    %29 = vector.broadcast %26 : vector<1x128xf32> to vector<8x128xf32>
    %30 = arith.mulf %9, %29 : vector<8x128xf32>
    %31 = vector.broadcast %28 : vector<1x128xf32> to vector<8x128xf32>
    %32 = arith.addf %30, %31 : vector<8x128xf32>
    %cst_16 = arith.constant 2.000000e-01 : f32
    %33 = vector.broadcast %cst_16 : f32 to vector<8x128xf32>
    %34 = arith.mulf %33, %32 : vector<8x128xf32>
    %35 = arith.maximumf %32, %34 : vector<8x128xf32>
    %c24 = arith.constant 24 : index
    %c0_17 = arith.constant 0 : index
    %36 = vector.load %arg2[%c24, %c0_17] : memref<408x128xf32, #tpu.memory_space<vmem>>, vector<128x128xf32>
    %cst_18 = arith.constant dense<0.000000e+00> : vector<8x128xf32>
    %37 = tpu.matmul %35, %36, %cst_18 {dimension_numbers = #tpu.dot_dimension_numbers<[1], [0], [0], [1], [0, 0, 1, 1], [], []>} : vector<8x128xf32>, vector<128x128xf32>, vector<8x128xf32> -> vector<8x128xf32>
    %c3 = arith.constant 3 : index
    %c0_19 = arith.constant 0 : index
    %38 = vector.load %arg3[%c3, %c0_19] : memref<10x128xf32, #tpu.memory_space<vmem>>, vector<1x128xf32>
    %39 = vector.broadcast %38 : vector<1x128xf32> to vector<8x128xf32>
    %40 = arith.addf %37, %39 : vector<8x128xf32>
    %c4 = arith.constant 4 : index
    %c0_20 = arith.constant 0 : index
    %41 = vector.load %arg3[%c4, %c0_20] : memref<10x128xf32, #tpu.memory_space<vmem>>, vector<1x128xf32>
    %c5 = arith.constant 5 : index
    %c0_21 = arith.constant 0 : index
    %42 = vector.load %arg3[%c5, %c0_21] : memref<10x128xf32, #tpu.memory_space<vmem>>, vector<1x128xf32>
    %cst_22 = arith.constant dense<0.000000e+00> : vector<128xf32>
    %43 = vector.multi_reduction <add>, %40, %cst_22 [0] : vector<8x128xf32> to vector<128xf32>
    %44 = vector.shape_cast %43 : vector<128xf32> to vector<1x128xf32>
    %45 = arith.mulf %40, %40 : vector<8x128xf32>
    %cst_23 = arith.constant dense<0.000000e+00> : vector<128xf32>
    %46 = vector.multi_reduction <add>, %45, %cst_23 [0] : vector<8x128xf32> to vector<128xf32>
    %47 = vector.shape_cast %46 : vector<128xf32> to vector<1x128xf32>
    %cst_24 = arith.constant 1.250000e-01 : f32
    %48 = vector.broadcast %cst_24 : f32 to vector<1x128xf32>
    %49 = arith.mulf %44, %48 : vector<1x128xf32>
    %cst_25 = arith.constant 1.250000e-01 : f32
    %50 = vector.broadcast %cst_25 : f32 to vector<1x128xf32>
    %51 = arith.mulf %47, %50 : vector<1x128xf32>
    %52 = arith.mulf %49, %49 : vector<1x128xf32>
    %53 = arith.subf %51, %52 : vector<1x128xf32>
    %cst_26 = arith.constant 9.99999974E-6 : f32
    %54 = vector.broadcast %cst_26 : f32 to vector<1x128xf32>
    %55 = arith.addf %53, %54 : vector<1x128xf32>
    %56 = math.rsqrt %55 : vector<1x128xf32>
    %57 = arith.mulf %41, %56 : vector<1x128xf32>
    %58 = arith.mulf %49, %57 : vector<1x128xf32>
    %59 = arith.subf %42, %58 : vector<1x128xf32>
    %60 = vector.broadcast %57 : vector<1x128xf32> to vector<8x128xf32>
    %61 = arith.mulf %40, %60 : vector<8x128xf32>
    %62 = vector.broadcast %59 : vector<1x128xf32> to vector<8x128xf32>
    %63 = arith.addf %61, %62 : vector<8x128xf32>
    %cst_27 = arith.constant 2.000000e-01 : f32
    %64 = vector.broadcast %cst_27 : f32 to vector<8x128xf32>
    %65 = arith.mulf %64, %63 : vector<8x128xf32>
    %66 = arith.maximumf %63, %65 : vector<8x128xf32>
    %c152 = arith.constant 152 : index
    %c0_28 = arith.constant 0 : index
    %67 = vector.load %arg2[%c152, %c0_28] : memref<408x128xf32, #tpu.memory_space<vmem>>, vector<128x128xf32>
    %cst_29 = arith.constant dense<0.000000e+00> : vector<8x128xf32>
    %68 = tpu.matmul %66, %67, %cst_29 {dimension_numbers = #tpu.dot_dimension_numbers<[1], [0], [0], [1], [0, 0, 1, 1], [], []>} : vector<8x128xf32>, vector<128x128xf32>, vector<8x128xf32> -> vector<8x128xf32>
    %c6 = arith.constant 6 : index
    %c0_30 = arith.constant 0 : index
    %69 = vector.load %arg3[%c6, %c0_30] : memref<10x128xf32, #tpu.memory_space<vmem>>, vector<1x128xf32>
    %70 = vector.broadcast %69 : vector<1x128xf32> to vector<8x128xf32>
    %71 = arith.addf %68, %70 : vector<8x128xf32>
    %c7 = arith.constant 7 : index
    %c0_31 = arith.constant 0 : index
    %72 = vector.load %arg3[%c7, %c0_31] : memref<10x128xf32, #tpu.memory_space<vmem>>, vector<1x128xf32>
    %c8 = arith.constant 8 : index
    %c0_32 = arith.constant 0 : index
    %73 = vector.load %arg3[%c8, %c0_32] : memref<10x128xf32, #tpu.memory_space<vmem>>, vector<1x128xf32>
    %cst_33 = arith.constant dense<0.000000e+00> : vector<128xf32>
    %74 = vector.multi_reduction <add>, %71, %cst_33 [0] : vector<8x128xf32> to vector<128xf32>
    %75 = vector.shape_cast %74 : vector<128xf32> to vector<1x128xf32>
    %76 = arith.mulf %71, %71 : vector<8x128xf32>
    %cst_34 = arith.constant dense<0.000000e+00> : vector<128xf32>
    %77 = vector.multi_reduction <add>, %76, %cst_34 [0] : vector<8x128xf32> to vector<128xf32>
    %78 = vector.shape_cast %77 : vector<128xf32> to vector<1x128xf32>
    %cst_35 = arith.constant 1.250000e-01 : f32
    %79 = vector.broadcast %cst_35 : f32 to vector<1x128xf32>
    %80 = arith.mulf %75, %79 : vector<1x128xf32>
    %cst_36 = arith.constant 1.250000e-01 : f32
    %81 = vector.broadcast %cst_36 : f32 to vector<1x128xf32>
    %82 = arith.mulf %78, %81 : vector<1x128xf32>
    %83 = arith.mulf %80, %80 : vector<1x128xf32>
    %84 = arith.subf %82, %83 : vector<1x128xf32>
    %cst_37 = arith.constant 9.99999974E-6 : f32
    %85 = vector.broadcast %cst_37 : f32 to vector<1x128xf32>
    %86 = arith.addf %84, %85 : vector<1x128xf32>
    %87 = math.rsqrt %86 : vector<1x128xf32>
    %88 = arith.mulf %72, %87 : vector<1x128xf32>
    %89 = arith.mulf %80, %88 : vector<1x128xf32>
    %90 = arith.subf %73, %89 : vector<1x128xf32>
    %91 = vector.broadcast %88 : vector<1x128xf32> to vector<8x128xf32>
    %92 = arith.mulf %71, %91 : vector<8x128xf32>
    %93 = vector.broadcast %90 : vector<1x128xf32> to vector<8x128xf32>
    %94 = arith.addf %92, %93 : vector<8x128xf32>
    %cst_38 = arith.constant 2.000000e-01 : f32
    %95 = vector.broadcast %cst_38 : f32 to vector<8x128xf32>
    %96 = arith.mulf %95, %94 : vector<8x128xf32>
    %97 = arith.maximumf %94, %96 : vector<8x128xf32>
    %c280 = arith.constant 280 : index
    %c0_39 = arith.constant 0 : index
    %98 = vector.load %arg2[%c280, %c0_39] : memref<408x128xf32, #tpu.memory_space<vmem>>, vector<128x128xf32>
    %cst_40 = arith.constant dense<0.000000e+00> : vector<8x128xf32>
    %99 = tpu.matmul %97, %98, %cst_40 {dimension_numbers = #tpu.dot_dimension_numbers<[1], [0], [0], [1], [0, 0, 1, 1], [], []>} : vector<8x128xf32>, vector<128x128xf32>, vector<8x128xf32> -> vector<8x128xf32>
    %c9 = arith.constant 9 : index
    %c0_41 = arith.constant 0 : index
    %100 = vector.load %arg3[%c9, %c0_41] : memref<10x128xf32, #tpu.memory_space<vmem>>, vector<1x128xf32>
    %101 = vector.broadcast %100 : vector<1x128xf32> to vector<8x128xf32>
    %102 = arith.addf %99, %101 : vector<8x128xf32>
    %103 = vector.extract_strided_slice %102 {offsets = [0, 0], sizes = [8, 3], strides = [1, 1]} : vector<8x128xf32> to vector<8x3xf32>
    %cst_42 = arith.constant 5.000000e-01 : f32
    %104 = vector.broadcast %cst_42 : f32 to vector<8x3xf32>
    %105 = arith.mulf %104, %103 : vector<8x3xf32>
    %106 = math.tanh %105 : vector<8x3xf32>
    %cst_43 = arith.constant 5.000000e-01 : f32
    %107 = vector.broadcast %cst_43 : f32 to vector<8x3xf32>
    %108 = arith.mulf %107, %106 : vector<8x3xf32>
    %cst_44 = arith.constant 5.000000e-01 : f32
    %109 = vector.broadcast %cst_44 : f32 to vector<8x3xf32>
    %110 = arith.addf %108, %109 : vector<8x3xf32>
    %c0_45 = arith.constant 0 : index
    %c0_46 = arith.constant 0 : index
    %111 = vector.load %arg4[%c0_45, %c0_46] : memref<8x3xf32, #tpu.memory_space<vmem>>, vector<8x3xf32>
    tpu.vector_store %arg4[%c0_45, %c0_46], %110 {strides = array<i32>} : memref<8x3xf32, #tpu.memory_space<vmem>>, vector<8x3xf32>,
    return
  }
}

</mosaic_0001>

<llo_original>
// kernel: tpu_custom_call.1
$region0: #{tpu_custom_call.1}
  #allocation0 [shape = 'u32[]', space=smem, size = 0x4, offset = 0x4, fixed_abs, tag = 'smem constant byte address 0x4 - core index']
  #allocation1 [shape = 'u32[72,128]{1,0:T(1,128)}', space=vmem, size = 0x9000, scoped, tag = 'internal scratch']
  %s0 = inlined_call_operand.vmem [shape: f32[8,10], index: 0, kind: input, shape index: {}]
  %s1 = inlined_call_operand.vmem [shape: f32[8,3], index: 1, kind: input, shape index: {}]
  %s2 = inlined_call_operand.hbm [shape: f32[408,128], index: 2, kind: input, shape index: {}]
  %s3 = inlined_call_operand.hbm [shape: f32[10,128], index: 3, kind: input, shape index: {}]
  %s4 = inlined_call_operand.vmem [shape: f32[8,3], index: 4, kind: output, shape index: {}]
  %s5 = sld [smem:[#allocation0]]
  $region34: #{tpu_custom_call.1} parent=0
    _
  %s7 = ssub.s32 1, %s5
  %s8 = scalar_select 0, %s7, %s5
  $region1: #{tpu_custom_call.1} parent=0
    #allocation2 [shape = 'u8[208896]{0}', space=vmem, size = 0x33000, scoped, tag = 'input window, operand 2, single buffered']
    #allocation3 [shape = 's32[1]{0}', space=sflag, size = 0x4, scoped, tag = 'scoped memory for tpu_custom_call.1']
    #allocation4 [shape = 'u8[8192]{0}', space=vmem, size = 0x2000, scoped, tag = 'input window, operand 3, single buffered']
    #allocation5 [shape = 's32[1]{0}', space=sflag, size = 0x4, scoped, tag = 'scoped memory for tpu_custom_call.1']
    %9 = vsyncpa [#allocation3], 0
    %10 = vsyncpa [#allocation5], 0
    // Predicated region
    $region2: #{tpu_custom_call.1} parent=1 // pred_check
      _
    $region3: #{tpu_custom_call.1} parent=1 // pred_check_branch
      %12 = sbr.rel (0) target = $region5
    $region4: #{tpu_custom_call.1} parent=1 // pred_region
      _
    $region5: #{tpu_custom_call.1} parent=1 // pred_fallthru
      _
    // Predicated region
    $region6: #{tpu_custom_call.1} parent=1 // pred_check
      _
    $region7: #{tpu_custom_call.1} parent=1 // pred_check_branch
      %14 = sbr.rel (0) target = $region9
    $region8: #{tpu_custom_call.1} parent=1 // pred_region
      _
    $region9: #{tpu_custom_call.1} parent=1 // pred_fallthru
      _
    // Predicated region
    $region10: #{tpu_custom_call.1} parent=1 // pred_check
      _
    $region11: #{tpu_custom_call.1} parent=1 // pred_check_branch
      %16 = sbr.rel (0) target = $region13
    $region12: #{tpu_custom_call.1} parent=1 // pred_region
      %18 = vsyncadd [#allocation3], 0
      %s19 = sshll.u32 %s2, 4
      %s20 = int_to_ptr.hbm [resolvable:$true] %s19
      %s21 = sshll.u32 [#allocation2], 4
      %s22 = int_to_ptr.vmem [resolvable:$true] %s21
      %27 = dma.hbm_to_vmem [thread:$0]  %s20, 6528, %s22, [#allocation3], 128, 128, 8
    $region13: #{tpu_custom_call.1} parent=1 // pred_fallthru
      _
    // Predicated region
    $region14: #{tpu_custom_call.1} parent=1 // pred_check
      _
    $region15: #{tpu_custom_call.1} parent=1 // pred_check_branch
      %29 = sbr.rel (0) target = $region17
    $region16: #{tpu_custom_call.1} parent=1 // pred_region
      %31 = vsyncadd [#allocation5], 0
      %s32 = sshll.u32 %s3, 4
      %s33 = int_to_ptr.hbm [resolvable:$true] %s32
      %s34 = sshll.u32 [#allocation4], 4
      %s35 = int_to_ptr.vmem [resolvable:$true] %s34
      %40 = dma.hbm_to_vmem [thread:$0]  %s33, 256, %s35, [#allocation5], 128, 128, 8
    $region17: #{tpu_custom_call.1} parent=1 // pred_fallthru
      _
    // Predicated region
    $region18: #{tpu_custom_call.1} parent=1 // pred_check
      _
    $region19: #{tpu_custom_call.1} parent=1 // pred_check_branch
      %42 = sbr.rel (0) target = $region21
    $region20: #{tpu_custom_call.1} parent=1 // pred_region
      %44 = dma.done [#allocation3], 6528
    $region21: #{tpu_custom_call.1} parent=1 // pred_fallthru
      _
    // Predicated region
    $region22: #{tpu_custom_call.1} parent=1 // pred_check
      _
    $region23: #{tpu_custom_call.1} parent=1 // pred_check_branch
      %46 = sbr.rel (0) target = $region25
    $region24: #{tpu_custom_call.1} parent=1 // pred_region
      %48 = dma.done [#allocation5], 256
    $region25: #{tpu_custom_call.1} parent=1 // pred_fallthru
      _
    %v49 = vld [vmem:[%s0] sm:$0xff]
    %v50 = vld [vmem:[%s1] sm:$0xff]
    %v51 = vld [vmem:[#allocation2] sm:$0xff]
    %v52 = vld [vmem:[#allocation2 + $0x8] sm:$0x3]
    %v53 = vld [vmem:[#allocation2 + $0x10] sm:$0x7]
    %vm54 = vcmask 23552
    %v56 = vsel %vm54, %v50, 0
    %vm58 = vcmask 1042432
    %v60 = vsel %vm58, %v53, 0
    %62 = vmatpush.msra.mxu0 0.0
    %63 = vmatpush.msra.mxu0 0.0
    %64 = vmatpush.msra.mxu0 0.0
    %65 = vmatpush.msra.mxu0 0.0
    %66 = vmatpush.msra.mxu0 0.0
    %67 = vmatpush.msra.mxu0 0.0
    %68 = vmatpush.msra.mxu0 0.0
    %69 = vmatpush.msra.mxu0 0.0
    %70 = vmatpush.msra.mxu0 0.0
    %71 = vmatpush.msra.mxu0 0.0
    %72 = vmatpush.msra.mxu0 0.0
    %73 = vmatpush.msra.mxu0 0.0
    %74 = vmatpush.msra.mxu0 0.0
    %75 = vmatpush.msra.mxu0 0.0
    %76 = vmatpush.msra.mxu0 0.0
    %77 = vmatpush.msra.mxu0 %v60
    %78 = vmatmul.f32.gmra.mxu0 %v56
    %v79 = vpop.f32.mrf.mxu0
    %v80 = vadd.f32 0.0, %v79
    %81 = vdwg.mxu0
    %vm82 = vcmask 80896
    %v84 = vsel %vm82, %v49, 0
    %vm86 = vcmask 1041408
    %v88 = vsel %vm86, %v52, 0
    %90 = vmatpush.msra.mxu0 0.0
    %91 = vmatpush.msra.mxu0 0.0
    %92 = vmatpush.msra.mxu0 0.0
    %93 = vmatpush.msra.mxu0 0.0
    %94 = vmatpush.msra.mxu0 0.0
    %95 = vmatpush.msra.mxu0 0.0
    %96 = vmatpush.msra.mxu0 0.0
    %97 = vmatpush.msra.mxu0 0.0
    %98 = vmatpush.msra.mxu0 0.0
    %99 = vmatpush.msra.mxu0 0.0
    %100 = vmatpush.msra.mxu0 0.0
    %101 = vmatpush.msra.mxu0 0.0
    %102 = vmatpush.msra.mxu0 0.0
    %103 = vmatpush.msra.mxu0 0.0
    %104 = vmatpush.msra.mxu0 %v88
    %105 = vmatpush.msra.mxu0 %v51
    %106 = vmatmul.f32.gmra.mxu0 %v84
    %v107 = vpop.f32.mrf.mxu0
    %v108 = vadd.f32 %v80, %v107
    %109 = vdwg.mxu0
    %v110 = vld [vmem:[#allocation4] sm:$0x1]
    %v111 = vperm.slane %v110, 0
    %v112 = vadd.f32 %v108, %v111
    %v113 = vld [vmem:[#allocation4 + $0x1] sm:$0x1]
    %v114 = vld [vmem:[#allocation4 + $0x2] sm:$0x1]
    %v115 = vrot.slane %v112, 4
    %v116 = vadd.f32 %v112, %v115
    %v117 = vrot.slane %v116, 2
    %v118 = vadd.f32 %v116, %v117
    %v119 = vrot.slane %v118, 1
    %v120 = vadd.f32 %v118, %v119
    %v121 = vmul.f32 %v112, %v112
    %v122 = vrot.slane %v121, 4
    %v123 = vadd.f32 %v121, %v122
    %v124 = vrot.slane %v123, 2
    %v125 = vadd.f32 %v123, %v124
    %v126 = vrot.slane %v125, 1
    %v127 = vadd.f32 %v125, %v126
    %v128 = vmul.f32 %v120, 0.125
    %v129 = vmul.f32 %v127, 0.125
    %v130 = vmul.f32 %v128, %v128
    %v131 = vsub.f32 %v129, %v130
    %v132 = vadd.f32 %v131, 1e-05
    %v133 = vrsqrt.pop %v132
    %v134 = vmul.f32 %v133, %v132
    %v135 = vmul.f32 %v134, %v133
    %v136 = vmul.f32 0.5, %v135
    %v137 = vsub.f32 1.5, %v136
    %v138 = vmul.f32 %v133, %v137
    %vm139 = vweird.f32 %v132
    %vm140 = vweird.f32 %v133
    %vm141 = vmor %vm139, %vm140
    %v142 = vsel %vm141, %v133, %v138
    %v143 = vmul.f32 %v113, %v142
    %v144 = vmul.f32 %v128, %v143
    %v145 = vsub.f32 %v114, %v144
    %v146 = vperm.slane %v143, 0
    %v147 = vmul.f32 %v112, %v146
    %v148 = vperm.slane %v145, 0
    %v149 = vadd.f32 %v147, %v148
    %v150 = vmul.f32 %v149, 0.2
    %v151 = vmax.f32 %v149, %v150
    %v152 = vld [vmem:[#allocation2 + $0x18] sm:$0xff]
    %v153 = vld [vmem:[#allocation2 + $0x20] sm:$0xff]
    %v154 = vld [vmem:[#allocation2 + $0x28] sm:$0xff]
    %v155 = vld [vmem:[#allocation2 + $0x30] sm:$0xff]
    %v156 = vld [vmem:[#allocation2 + $0x38] sm:$0xff]
    %v157 = vld [vmem:[#allocation2 + $0x40] sm:$0xff]
    %v158 = vld [vmem:[#allocation2 + $0x48] sm:$0xff]
    %v159 = vld [vmem:[#allocation2 + $0x50] sm:$0xff]
    %v160 = vld [vmem:[#allocation2 + $0x58] sm:$0xff]
    %v161 = vld [vmem:[#allocation2 + $0x60] sm:$0xff]
    %v162 = vld [vmem:[#allocation2 + $0x68] sm:$0xff]
    %v163 = vld [vmem:[#allocation2 + $0x70] sm:$0xff]
    %v164 = vld [vmem:[#allocation2 + $0x78] sm:$0xff]
    %v165 = vld [vmem:[#allocation2 + $0x80] sm:$0xff]
    %v166 = vld [vmem:[#allocation2 + $0x88] sm:$0xff]
    %v167 = vld [vmem:[#allocation2 + $0x90] sm:$0xff]
    %v168 = vld [vmem:[#allocation4 + $0x3] sm:$0x1]
    %v169 = vperm.slane %v168, 0
    %170 = vmatpush.msra.mxu0 %v167
    %171 = vmatpush.msra.mxu0 %v166
    %172 = vmatpush.msra.mxu0 %v165
    %173 = vmatpush.msra.mxu0 %v164
    %174 = vmatpush.msra.mxu0 %v163
    %175 = vmatpush.msra.mxu0 %v162
    %176 = vmatpush.msra.mxu0 %v161
    %177 = vmatpush.msra.mxu0 %v160
    %178 = vmatpush.msra.mxu0 %v159
    %179 = vmatpush.msra.mxu0 %v158
    %180 = vmatpush.msra.mxu0 %v157
    %181 = vmatpush.msra.mxu0 %v156
    %182 = vmatpush.msra.mxu0 %v155
    %183 = vmatpush.msra.mxu0 %v154
    %184 = vmatpush.msra.mxu0 %v153
    %185 = vmatpush.msra.mxu0 %v152
    %186 = vmatmul.f32.gmra.mxu0 %v151
    %v187 = vpop.f32.mrf.mxu0
    %v188 = vadd.f32 %v169, %v187
    %189 = vdwg.mxu0
    %v190 = vld [vmem:[#allocation4 + $0x4] sm:$0x1]
    %v191 = vld [vmem:[#allocation4 + $0x5] sm:$0x1]
    %v192 = vrot.slane %v188, 4
    %v193 = vadd.f32 %v188, %v192
    %v194 = vrot.slane %v193, 2
    %v195 = vadd.f32 %v193, %v194
    %v196 = vrot.slane %v195, 1
    %v197 = vadd.f32 %v195, %v196
    %v198 = vmul.f32 %v188, %v188
    %v199 = vrot.slane %v198, 4
    %v200 = vadd.f32 %v198, %v199
    %v201 = vrot.slane %v200, 2
    %v202 = vadd.f32 %v200, %v201
    %v203 = vrot.slane %v202, 1
    %v204 = vadd.f32 %v202, %v203
    %v205 = vmul.f32 %v197, 0.125
    %v206 = vmul.f32 %v204, 0.125
    %v207 = vmul.f32 %v205, %v205
    %v208 = vsub.f32 %v206, %v207
    %v209 = vadd.f32 %v208, 1e-05
    %v210 = vrsqrt.pop %v209
    %v211 = vmul.f32 %v210, %v209
    %v212 = vmul.f32 %v211, %v210
    %v213 = vmul.f32 0.5, %v212
    %v214 = vsub.f32 1.5, %v213
    %v215 = vmul.f32 %v210, %v214
    %vm216 = vweird.f32 %v209
    %vm217 = vweird.f32 %v210
    %vm218 = vmor %vm216, %vm217
    %v219 = vsel %vm218, %v210, %v215
    %v220 = vmul.f32 %v190, %v219
    %v221 = vmul.f32 %v205, %v220
    %v222 = vsub.f32 %v191, %v221
    %v223 = vperm.slane %v220, 0
    %v224 = vmul.f32 %v188, %v223
    %v225 = vperm.slane %v222, 0
    %v226 = vadd.f32 %v224, %v225
    %v227 = vmul.f32 %v226, 0.2
    %v228 = vmax.f32 %v226, %v227
    %v229 = vld [vmem:[#allocation2 + $0x98] sm:$0xff]
    %v230 = vld [vmem:[#allocation2 + $0xa0] sm:$0xff]
    %v231 = vld [vmem:[#allocation2 + $0xa8] sm:$0xff]
    %v232 = vld [vmem:[#allocation2 + $0xb0] sm:$0xff]
    %v233 = vld [vmem:[#allocation2 + $0xb8] sm:$0xff]
    %v234 = vld [vmem:[#allocation2 + $0xc0] sm:$0xff]
    %v235 = vld [vmem:[#allocation2 + $0xc8] sm:$0xff]
    %v236 = vld [vmem:[#allocation2 + $0xd0] sm:$0xff]
    %v237 = vld [vmem:[#allocation2 + $0xd8] sm:$0xff]
    %v238 = vld [vmem:[#allocation2 + $0xe0] sm:$0xff]
    %v239 = vld [vmem:[#allocation2 + $0xe8] sm:$0xff]
    %v240 = vld [vmem:[#allocation2 + $0xf0] sm:$0xff]
    %v241 = vld [vmem:[#allocation2 + $0xf8] sm:$0xff]
    %v242 = vld [vmem:[#allocation2 + $0x100] sm:$0xff]
    %v243 = vld [vmem:[#allocation2 + $0x108] sm:$0xff]
    %v244 = vld [vmem:[#allocation2 + $0x110] sm:$0xff]
    %v245 = vld [vmem:[#allocation4 + $0x6] sm:$0x1]
    %v246 = vperm.slane %v245, 0
    %247 = vmatpush.msra.mxu0 %v244
    %248 = vmatpush.msra.mxu0 %v243
    %249 = vmatpush.msra.mxu0 %v242
    %250 = vmatpush.msra.mxu0 %v241
    %251 = vmatpush.msra.mxu0 %v240
    %252 = vmatpush.msra.mxu0 %v239
    %253 = vmatpush.msra.mxu0 %v238
    %254 = vmatpush.msra.mxu0 %v237
    %255 = vmatpush.msra.mxu0 %v236
    %256 = vmatpush.msra.mxu0 %v235
    %257 = vmatpush.msra.mxu0 %v234
    %258 = vmatpush.msra.mxu0 %v233
    %259 = vmatpush.msra.mxu0 %v232
    %260 = vmatpush.msra.mxu0 %v231
    %261 = vmatpush.msra.mxu0 %v230
    %262 = vmatpush.msra.mxu0 %v229
    %263 = vmatmul.f32.gmra.mxu0 %v228
    %v264 = vpop.f32.mrf.mxu0
    %v265 = vadd.f32 %v246, %v264
    %266 = vdwg.mxu0
    %v267 = vld [vmem:[#allocation4 + $0x7] sm:$0x1]
    %v268 = vld [vmem:[#allocation4 + $0x8] sm:$0x1]
    %v269 = vrot.slane %v265, 4
    %v270 = vadd.f32 %v265, %v269
    %v271 = vrot.slane %v270, 2
    %v272 = vadd.f32 %v270, %v271
    %v273 = vrot.slane %v272, 1
    %v274 = vadd.f32 %v272, %v273
    %v275 = vmul.f32 %v265, %v265
    %v276 = vrot.slane %v275, 4
    %v277 = vadd.f32 %v275, %v276
    %v278 = vrot.slane %v277, 2
    %v279 = vadd.f32 %v277, %v278
    %v280 = vrot.slane %v279, 1
    %v281 = vadd.f32 %v279, %v280
    %v282 = vmul.f32 %v274, 0.125
    %v283 = vmul.f32 %v281, 0.125
    %v284 = vmul.f32 %v282, %v282
    %v285 = vsub.f32 %v283, %v284
    %v286 = vadd.f32 %v285, 1e-05
    %v287 = vrsqrt.pop %v286
    %v288 = vmul.f32 %v287, %v286
    %v289 = vmul.f32 %v288, %v287
    %v290 = vmul.f32 0.5, %v289
    %v291 = vsub.f32 1.5, %v290
    %v292 = vmul.f32 %v287, %v291
    %vm293 = vweird.f32 %v286
    %vm294 = vweird.f32 %v287
    %vm295 = vmor %vm293, %vm294
    %v296 = vsel %vm295, %v287, %v292
    %v297 = vmul.f32 %v267, %v296
    %v298 = vmul.f32 %v282, %v297
    %v299 = vsub.f32 %v268, %v298
    %v300 = vperm.slane %v297, 0
    %v301 = vmul.f32 %v265, %v300
    %v302 = vperm.slane %v299, 0
    %v303 = vadd.f32 %v301, %v302
    %v304 = vmul.f32 %v303, 0.2
    %v305 = vmax.f32 %v303, %v304
    %v306 = vld [vmem:[#allocation2 + $0x118] sm:$0xff]
    %v307 = vld [vmem:[#allocation2 + $0x120] sm:$0xff]
    %v308 = vld [vmem:[#allocation2 + $0x128] sm:$0xff]
    %v309 = vld [vmem:[#allocation2 + $0x130] sm:$0xff]
    %v310 = vld [vmem:[#allocation2 + $0x138] sm:$0xff]
    %v311 = vld [vmem:[#allocation2 + $0x140] sm:$0xff]
    %v312 = vld [vmem:[#allocation2 + $0x148] sm:$0xff]
    %v313 = vld [vmem:[#allocation2 + $0x150] sm:$0xff]
    %v314 = vld [vmem:[#allocation2 + $0x158] sm:$0xff]
    %v315 = vld [vmem:[#allocation2 + $0x160] sm:$0xff]
    %v316 = vld [vmem:[#allocation2 + $0x168] sm:$0xff]
    %v317 = vld [vmem:[#allocation2 + $0x170] sm:$0xff]
    %v318 = vld [vmem:[#allocation2 + $0x178] sm:$0xff]
    %v319 = vld [vmem:[#allocation2 + $0x180] sm:$0xff]
    %v320 = vld [vmem:[#allocation2 + $0x188] sm:$0xff]
    %v321 = vld [vmem:[#allocation2 + $0x190] sm:$0xff]
    %v322 = vld [vmem:[#allocation4 + $0x9] sm:$0x1]
    %v323 = vperm.slane %v322, 0
    %324 = vmatpush.msra.mxu0 %v321
    %325 = vmatpush.msra.mxu0 %v320
    %326 = vmatpush.msra.mxu0 %v319
    %327 = vmatpush.msra.mxu0 %v318
    %328 = vmatpush.msra.mxu0 %v317
    %329 = vmatpush.msra.mxu0 %v316
    %330 = vmatpush.msra.mxu0 %v315
    %331 = vmatpush.msra.mxu0 %v314
    %332 = vmatpush.msra.mxu0 %v313
    %333 = vmatpush.msra.mxu0 %v312
    %334 = vmatpush.msra.mxu0 %v311
    %335 = vmatpush.msra.mxu0 %v310
    %336 = vmatpush.msra.mxu0 %v309
    %337 = vmatpush.msra.mxu0 %v308
    %338 = vmatpush.msra.mxu0 %v307
    %339 = vmatpush.msra.mxu0 %v306
    %340 = vmatmul.f32.gmra.mxu0 %v305
    %v341 = vpop.f32.mrf.mxu0
    %v342 = vadd.f32 %v323, %v341
    %343 = vdwg.mxu0
    %v344 = vmul.f32 %v342, 0.5
    %v345 = vtanh.pop %v344
    %v346 = vmul.f32 %v345, 0.5
    %v347 = vadd.f32 %v346, 0.5
    %348 = vst.msk [vmem:[%s4] sm:$0xff] %vm54, %v347
    // Predicated region
    $region26: #{tpu_custom_call.1} parent=1 // pred_check
      _
    $region27: #{tpu_custom_call.1} parent=1 // pred_check_branch
      %350 = sbr.rel (0) target = $region29
    $region28: #{tpu_custom_call.1} parent=1 // pred_region
      _
    $region29: #{tpu_custom_call.1} parent=1 // pred_fallthru
      _
    // Predicated region
    $region30: #{tpu_custom_call.1} parent=1 // pred_check
      _
    $region31: #{tpu_custom_call.1} parent=1 // pred_check_branch
      %352 = sbr.rel (0) target = $region33
    $region32: #{tpu_custom_call.1} parent=1 // pred_region
      _
    $region33: #{tpu_custom_call.1} parent=1 // pred_fallthru
      _
    %353 = vsyncpa [#allocation3], 1
    %354 = vsyncpa [#allocation5], 1

</llo_original>
